<compile_context>
chip_gen: v5e
topology: v5e:2x2
jax: 0.10.0
libtpu: 0.0.40
codegen_flags: <defaults>
</compile_context>

<pallas_src>
import functools

import jax
import jax.numpy as jnp
from jax import lax
from jax.experimental import pallas as pl
from jax.experimental.pallas import tpu as pltpu


def _regression_kernel(x_ref, w1_ref, fcw_ref, fcb_ref, posm_ref, probm_ref,
                       out_ref, *, block_n, C, F, HW, chunk_hw):
    # x_ref:     (block_n*C, HW) bf16   batch block, channel rows flattened
    # w1_ref:    (C, F)          bf16   1x1-conv ("stem") weight
    # fcw_ref:   (F, Kpad)       f32    fc weight, pre-scaled by 1/(H*W)
    # fcb_ref:   (1, Kpad)       f32    fc bias (zero in padded columns)
    # posm_ref:  (1, Kpad)       f32    1.0 where index in pos_out_inds
    # probm_ref: (1, Kpad)       f32    1.0 where index in prob_out_inds
    # out_ref:   (block_n, Kpad) f32
    w1 = w1_ref[...]                                      # (C, F) bf16
    n_chunks = HW // chunk_hw

    def stem_chunk(xc):
        # stem: w1^T @ x_chunk -> (F, chunk); chunk lane-dense; MXU f32 acc
        feats = lax.dot_general(
            w1, xc, dimension_numbers=(((0,), (0,)), ((), ())),
            preferred_element_type=jnp.float32)           # (F, chunk) f32
        feats = jnp.maximum(feats, 0.0)                   # ReLU (VPU)
        # spatial sum; the 1/(H*W) of the average pool lives in fcw_ref
        return jnp.sum(feats, axis=1, keepdims=True)      # (F, 1) lane reduce

    pooled_cols = []
    for n in range(block_n):                              # static, bounded unroll
        row0 = n * C
        if n_chunks == 1:
            pooled_n = stem_chunk(x_ref[pl.ds(row0, C), :])
        else:
            def body(ci, acc, row0=row0):
                start = pl.multiple_of(ci * chunk_hw, chunk_hw)
                return acc + stem_chunk(
                    x_ref[pl.ds(row0, C), pl.ds(start, chunk_hw)])
            pooled_n = lax.fori_loop(0, n_chunks, body,
                                     jnp.zeros((F, 1), jnp.float32))
        pooled_cols.append(pooled_n)

    # (F, block_n): samples on lanes; no scratch buffer / masked row stores.
    if block_n == 1:
        pooled = pooled_cols[0]
    else:
        pooled = jnp.concatenate(pooled_cols, axis=1)

    # fc head: contract F -> lane-dense (block_n, Kpad) output slab.
    out = lax.dot_general(
        pooled, fcw_ref[...], dimension_numbers=(((0,), (0,)), ((), ())),
        preferred_element_type=jnp.float32) + fcb_ref[...]

    # selective exp / sigmoid (exp first, then sigmoid, matching the in-place
    # PyTorch loop ordering for overlapping index sets).
    out = jnp.where(posm_ref[...] > 0.0, jnp.exp(out), out)
    out = jnp.where(probm_ref[...] > 0.0, jax.nn.sigmoid(out), out)

    out_ref[...] = out.astype(out_ref.dtype)


def _device_kind() -> str:
    try:
        return jax.devices()[0].device_kind.lower()
    except Exception:
        return ""


def _is_v7x(kind: str) -> bool:
    # v7x is the only current chip with 2 TensorCores and 64 MiB VMEM per TC.
    return "v7" in kind or "7x" in kind


def _pick_block_n(n, c, hw, kind):
    """Chip-aware batch-block size for the 2-D (N*C, HW) bf16 x layout."""
    is_v7x = _is_v7x(kind)
    x_bytes = c * hw * 2                           # bf16 bytes per sample
    # Double-buffered x budget: v7x has 64 MiB physical / 32 MiB scoped VMEM,
    # v5e/v6e have 128 MiB physical, so a larger tile is allowed there.
    budget = (12 if is_v7x else 20) << 20
    max_unroll = 16                                # bounds unrolled sample loop

    # Layout guard: block rows (block_n*C) must be a multiple of 8 sublanes or
    # cover the full first dim, per the (8,128) BlockSpec rule.
    def layout_ok(b):
        return (b * c) % 8 == 0 or b == n

    divisors = [b for b in range(1, n + 1) if n % b == 0 and layout_ok(b)]
    fits = [b for b in divisors
            if b <= max_unroll and 2 * b * x_bytes <= budget]
    if not fits:
        return min(divisors)                       # smallest layout-valid block
    if is_v7x:
        # keep the grid a multiple of 2 so both TensorCores get work, when a
        # fitting block allows it
        even = [b for b in fits if (n // b) % 2 == 0]
        if even:
            return max(even)
    return max(fits)                               # v5e/v6e: fewest grid steps


def _pick_chunk_hw(hw):
    """Bound the f32 (F, chunk) feats intermediate to <=1024 lanes."""
    if hw <= 1024:
        return hw
    for chunk in (1024, 512, 256, 128):
        if hw % chunk == 0:
            return chunk
    return hw  # fallback: no chunking (HW not 128-divisible)


@functools.partial(jax.jit, static_argnames=("pos_out_inds", "prob_out_inds"))
def regression_model_forward(x_nchw, w1, fc_w, fc_b,
                             pos_out_inds=(), prob_out_inds=()):
    """Forward pass. x_nchw: (N, C, H, W) float (PyTorch layout)."""
    N, C, H, W = x_nchw.shape
    HW = H * W
    F = w1.shape[1]            # in_features of the replaced fc
    K = fc_w.shape[1]          # out_features
    Kpad = max(((K + 127) // 128) * 128, 128)   # lane-dense output slab

    kind = _device_kind()
    block_n = _pick_block_n(N, C, HW, kind)
    chunk_hw = _pick_chunk_hw(HW)

    # (N, C, H, W) -> (N*C, HW): contiguous collapse (no transpose / extra HBM
    # round trip).  bf16 halves the dominant input tile's HBM/VMEM bytes and
    # the 2-D layout keeps the bf16 (16, 128) tiles sublane-dense.
    # NOTE: bf16 stem slightly loosens tolerance vs an f32 PyTorch backbone;
    # the bundled reference mirrors it.
    x2d = x_nchw.reshape(N * C, HW).astype(jnp.bfloat16)
    w1_bf = w1.astype(jnp.bfloat16)

    # One-time weight transforms: fold the 1/(H*W) of the global average pool
    # into the fc weight, pad the head (weight / bias / masks) to Kpad lanes.
    fcw_p = jnp.zeros((F, Kpad), jnp.float32).at[:, :K].set(
        fc_w.astype(jnp.float32) / float(HW))
    fcb_p = jnp.zeros((1, Kpad), jnp.float32).at[0, :K].set(
        fc_b.astype(jnp.float32))
    pos_mask = jnp.zeros((1, Kpad), jnp.float32)
    for i in pos_out_inds:
        pos_mask = pos_mask.at[0, i].set(1.0)
    prob_mask = jnp.zeros((1, Kpad), jnp.float32)
    for i in prob_out_inds:
        prob_mask = prob_mask.at[0, i].set(1.0)

    kernel = functools.partial(_regression_kernel, block_n=block_n, C=C, F=F,
                               HW=HW, chunk_hw=chunk_hw)

    grid_spec = pltpu.PrefetchScalarGridSpec(
        num_scalar_prefetch=0,
        grid=(N // block_n,),
        in_specs=[
            pl.BlockSpec((block_n * C, HW), lambda i: (i, 0)),   # x (2-D, dense)
            pl.BlockSpec((C, F), lambda i: (0, 0)),              # stem weight
            pl.BlockSpec((F, Kpad), lambda i: (0, 0)),           # fc weight
            pl.BlockSpec((1, Kpad), lambda i: (0, 0)),           # fc bias
            pl.BlockSpec((1, Kpad), lambda i: (0, 0)),           # pos mask
            pl.BlockSpec((1, Kpad), lambda i: (0, 0)),           # prob mask
        ],
        out_specs=pl.BlockSpec((block_n, Kpad), lambda i: (i, 0)),
    )

    cost = pl.CostEstimate(
        flops=(2 * N * HW * C * F       # stem matmul
               + 2 * N * F * HW         # ReLU + spatial sum (element ops)
               + 2 * N * F * Kpad),     # fc head
        transcendentals=2 * N * Kpad,   # exp + sigmoid over the padded slab
        bytes_accessed=(N * C * HW * 2 + C * F * 2
                        + (F + 3) * Kpad * 4 + N * Kpad * 4),
    )

    out_padded = pl.pallas_call(
        kernel,
        out_shape=jax.ShapeDtypeStruct((N, Kpad), jnp.float32),
        grid_spec=grid_spec,
        compiler_params=pltpu.CompilerParams(
            dimension_semantics=("parallel",),
            # block_n sizing keeps double-buffered tiles within v7x's 64 MiB
            # physical VMEM; 32 MiB scoped is safe on v5e/v6e/v7x.
            vmem_limit_bytes=32 * 1024 * 1024),
        cost_estimate=cost,
    )(x2d, w1_bf, fcw_p, fcb_p, pos_mask, prob_mask)

    return out_padded[:, :K]


def _reference_forward(x_nchw, w1, fc_w, fc_b, pos_out_inds, prob_out_inds):
    """Pure-JAX reference (mirrors the kernel's bf16 stem precision)."""
    N, C, H, W = x_nchw.shape
    x = x_nchw.reshape(N, C, H * W).astype(jnp.bfloat16)
    feats = jnp.einsum("ncp,cf->npf", x, w1.astype(jnp.bfloat16),
                       preferred_element_type=jnp.float32)
    feats = jnp.maximum(feats, 0.0)
    pooled = feats.mean(axis=1)
    out = pooled @ fc_w + fc_b
    for i in pos_out_inds:
        out = out.at[:, i].set(jnp.exp(out[:, i]))
    for i in prob_out_inds:
        out = out.at[:, i].set(jax.nn.sigmoid(out[:, i]))
    return out


if __name__ == "__main__":
    # Small shapes consistent with the module's forward:
    #   image batch (N, C, H, W), backbone feature width F (= fc.in_features),
    #   regression head out_features K.
    N, C, H, W = 2, 4, 16, 16
    F = 32          # in_features of the replaced fc
    K = 8           # out_features
    pos_out_inds = (0, 1)
    prob_out_inds = (2, 3)

    key = jax.random.PRNGKey(0)
    kx, kw1, kfw, kfb = jax.random.split(key, 4)

    x = jax.random.normal(kx, (N, C, H, W), dtype=jnp.float32)
    # Deterministic parameter init (uniform +-1/sqrt(fan_in), PyTorch-style).
    w1 = jax.random.uniform(kw1, (C, F), jnp.float32,
                            minval=-1.0, maxval=1.0) / jnp.sqrt(C)
    fc_w = jax.random.uniform(kfw, (F, K), jnp.float32,
                              minval=-1.0, maxval=1.0) / jnp.sqrt(F)
    fc_b = jax.random.uniform(kfb, (K,), jnp.float32,
                              minval=-1.0, maxval=1.0) / jnp.sqrt(F)

    out = regression_model_forward(x, w1, fc_w, fc_b,
                                   pos_out_inds=pos_out_inds,
                                   prob_out_inds=prob_out_inds)
    out = jax.block_until_ready(out)

    ref = _reference_forward(x, w1, fc_w, fc_b, pos_out_inds, prob_out_inds)
    assert out.shape == (N, K) and out.dtype == jnp.float32
    assert jnp.allclose(out, ref, atol=1e-4, rtol=1e-4), "mismatch vs reference"

    print("KERNEL_OK")
</pallas_src>

<mosaic_0001>
module attributes {stable_mosaic.version = 11 : i64} {
  func.func @_regression_kernel(%arg0: i32, %arg1: memref<8x256xbf16, #tpu.memory_space<vmem>>, %arg2: memref<4x32xbf16, #tpu.memory_space<vmem>>, %arg3: memref<32x128xf32, #tpu.memory_space<vmem>>, %arg4: memref<1x128xf32, #tpu.memory_space<vmem>>, %arg5: memref<1x128xf32, #tpu.memory_space<vmem>>, %arg6: memref<1x128xf32, #tpu.memory_space<vmem>>, %arg7: memref<2x128xf32, #tpu.memory_space<vmem>>) attributes {dimension_semantics = [#tpu.dimension_semantics<parallel>], iteration_bounds = array<i64: 1>, scalar_prefetch = 0 : i64, scratch_operands = 0 : i64, tpu.core_type = #tpu.core_type<tc>, window_params = [{transform_indices = @transform_0, window_bounds = array<i64: 8, 256>}, {pipeline_mode = #tpu.pipeline_mode<synchronous>, transform_indices = @transform_1, window_bounds = array<i64: 4, 32>}, {pipeline_mode = #tpu.pipeline_mode<synchronous>, transform_indices = @transform_2, window_bounds = array<i64: 32, 128>}, {pipeline_mode = #tpu.pipeline_mode<synchronous>, transform_indices = @transform_3, window_bounds = array<i64: 1, 128>}, {pipeline_mode = #tpu.pipeline_mode<synchronous>, transform_indices = @transform_4, window_bounds = array<i64: 1, 128>}, {pipeline_mode = #tpu.pipeline_mode<synchronous>, transform_indices = @transform_5, window_bounds = array<i64: 1, 128>}, {transform_indices = @transform_6, window_bounds = array<i64: 2, 128>}]} {
    %c0 = arith.constant 0 : index
    %c0_0 = arith.constant 0 : index
    %0 = vector.load %arg2[%c0, %c0_0] : memref<4x32xbf16, #tpu.memory_space<vmem>>, vector<4x32xbf16>
    %c0_1 = arith.constant 0 : index
    %c0_2 = arith.constant 0 : index
    %1 = vector.load %arg1[%c0_1, %c0_2] : memref<8x256xbf16, #tpu.memory_space<vmem>>, vector<4x256xbf16>
    %cst = arith.constant dense<0.000000e+00> : vector<32x256xf32>
    %2 = tpu.matmul %0, %1, %cst {dimension_numbers = #tpu.dot_dimension_numbers<[0], [0], [1], [1], [0, 1, 1, 1], [], []>} : vector<4x32xbf16>, vector<4x256xbf16>, vector<32x256xf32> -> vector<32x256xf32>
    %cst_3 = arith.constant 0.000000e+00 : f32
    %3 = vector.broadcast %cst_3 : f32 to vector<32x256xf32>
    %4 = arith.maximumf %2, %3 : vector<32x256xf32>
    %cst_4 = arith.constant dense<0.000000e+00> : vector<32xf32>
    %5 = vector.multi_reduction <add>, %4, %cst_4 [1] : vector<32x256xf32> to vector<32xf32>
    %6 = vector.shape_cast %5 : vector<32xf32> to vector<32x1xf32>
    %c4 = arith.constant 4 : index
    %c0_5 = arith.constant 0 : index
    %7 = vector.load %arg1[%c4, %c0_5] : memref<8x256xbf16, #tpu.memory_space<vmem>>, vector<4x256xbf16>
    %cst_6 = arith.constant dense<0.000000e+00> : vector<32x256xf32>
    %8 = tpu.matmul %0, %7, %cst_6 {dimension_numbers = #tpu.dot_dimension_numbers<[0], [0], [1], [1], [0, 1, 1, 1], [], []>} : vector<4x32xbf16>, vector<4x256xbf16>, vector<32x256xf32> -> vector<32x256xf32>
    %cst_7 = arith.constant 0.000000e+00 : f32
    %9 = vector.broadcast %cst_7 : f32 to vector<32x256xf32>
    %10 = arith.maximumf %8, %9 : vector<32x256xf32>
    %cst_8 = arith.constant dense<0.000000e+00> : vector<32xf32>
    %11 = vector.multi_reduction <add>, %10, %cst_8 [1] : vector<32x256xf32> to vector<32xf32>
    %12 = vector.shape_cast %11 : vector<32xf32> to vector<32x1xf32>
    %13 = tpu.concatenate %6, %12 in 1 : vector<32x1xf32>, vector<32x1xf32> -> vector<32x2xf32>
    %c0_9 = arith.constant 0 : index
    %c0_10 = arith.constant 0 : index
    %14 = vector.load %arg3[%c0_9, %c0_10] : memref<32x128xf32, #tpu.memory_space<vmem>>, vector<32x128xf32>
    %cst_11 = arith.constant dense<0.000000e+00> : vector<2x128xf32>
    %15 = tpu.matmul %13, %14, %cst_11 {dimension_numbers = #tpu.dot_dimension_numbers<[0], [0], [1], [1], [0, 1, 1, 1], [], []>} : vector<32x2xf32>, vector<32x128xf32>, vector<2x128xf32> -> vector<2x128xf32>
    %c0_12 = arith.constant 0 : index
    %c0_13 = arith.constant 0 : index
    %16 = vector.load %arg4[%c0_12, %c0_13] : memref<1x128xf32, #tpu.memory_space<vmem>>, vector<1x128xf32>
    %17 = vector.broadcast %16 : vector<1x128xf32> to vector<2x128xf32>
    %18 = arith.addf %15, %17 : vector<2x128xf32>
    %c0_14 = arith.constant 0 : index
    %c0_15 = arith.constant 0 : index
    %19 = vector.load %arg5[%c0_14, %c0_15] : memref<1x128xf32, #tpu.memory_space<vmem>>, vector<1x128xf32>
    %cst_16 = arith.constant 0.000000e+00 : f32
    %20 = vector.broadcast %cst_16 : f32 to vector<1x128xf32>
    %21 = arith.cmpf ogt, %19, %20 : vector<1x128xf32>
    %22 = math.exp %18 : vector<2x128xf32>
    %23 = vector.shape_cast %21 : vector<1x128xi1> to vector<1x128xi1>
    %24 = vector.broadcast %23 : vector<1x128xi1> to vector<2x128xi1>
    %25 = arith.select %24, %22, %18 : vector<2x128xi1>, vector<2x128xf32>
    %c0_17 = arith.constant 0 : index
    %c0_18 = arith.constant 0 : index
    %26 = vector.load %arg6[%c0_17, %c0_18] : memref<1x128xf32, #tpu.memory_space<vmem>>, vector<1x128xf32>
    %cst_19 = arith.constant 0.000000e+00 : f32
    %27 = vector.broadcast %cst_19 : f32 to vector<1x128xf32>
    %28 = arith.cmpf ogt, %26, %27 : vector<1x128xf32>
    %29 = arith.negf %25 : vector<2x128xf32>
    %30 = math.exp %29 : vector<2x128xf32>
    %cst_20 = arith.constant 1.000000e+00 : f32
    %31 = vector.broadcast %cst_20 : f32 to vector<2x128xf32>
    %32 = arith.addf %31, %30 : vector<2x128xf32>
    %33 = arith.divf %31, %32 : vector<2x128xf32>
    %34 = vector.shape_cast %28 : vector<1x128xi1> to vector<1x128xi1>
    %35 = vector.broadcast %34 : vector<1x128xi1> to vector<2x128xi1>
    %36 = arith.select %35, %33, %25 : vector<2x128xi1>, vector<2x128xf32>
    %c0_21 = arith.constant 0 : index
    %c0_22 = arith.constant 0 : index
    %37 = vector.load %arg7[%c0_21, %c0_22] : memref<2x128xf32, #tpu.memory_space<vmem>>, vector<2x128xf32>
    tpu.vector_store %arg7[%c0_21, %c0_22], %36 {strides = array<i32>} : memref<2x128xf32, #tpu.memory_space<vmem>>, vector<2x128xf32>,
    return
  }
  func.func @transform_0(%arg0: i32) -> (i32, i32) {
    %c0_i32 = arith.constant 0 : i32
    %c0_i32_0 = arith.constant 0 : i32
    return %arg0, %c0_i32 : i32, i32
  }
  func.func @transform_1(%arg0: i32) -> (i32, i32) {
    %c0_i32 = arith.constant 0 : i32
    %c0_i32_0 = arith.constant 0 : i32
    %c0_i32_1 = arith.constant 0 : i32
    return %c0_i32, %c0_i32_0 : i32, i32
  }
  func.func @transform_2(%arg0: i32) -> (i32, i32) {
    %c0_i32 = arith.constant 0 : i32
    %c0_i32_0 = arith.constant 0 : i32
    %c0_i32_1 = arith.constant 0 : i32
    return %c0_i32, %c0_i32_0 : i32, i32
  }
  func.func @transform_3(%arg0: i32) -> (i32, i32) {
    %c0_i32 = arith.constant 0 : i32
    %c0_i32_0 = arith.constant 0 : i32
    %c0_i32_1 = arith.constant 0 : i32
    return %c0_i32, %c0_i32_0 : i32, i32
  }
  func.func @transform_4(%arg0: i32) -> (i32, i32) {
    %c0_i32 = arith.constant 0 : i32
    %c0_i32_0 = arith.constant 0 : i32
    %c0_i32_1 = arith.constant 0 : i32
    return %c0_i32, %c0_i32_0 : i32, i32
  }
  func.func @transform_5(%arg0: i32) -> (i32, i32) {
    %c0_i32 = arith.constant 0 : i32
    %c0_i32_0 = arith.constant 0 : i32
    %c0_i32_1 = arith.constant 0 : i32
    return %c0_i32, %c0_i32_0 : i32, i32
  }
  func.func @transform_6(%arg0: i32) -> (i32, i32) {
    %c0_i32 = arith.constant 0 : i32
    %c0_i32_0 = arith.constant 0 : i32
    return %arg0, %c0_i32 : i32, i32
  }
}

</mosaic_0001>

<llo_original>
// kernel: regression_model_forward.1
$region0: #{regression_model_forward.1}
  #allocation0 [shape = 'u32[]', space=smem, size = 0x4, offset = 0x4, fixed_abs, tag = 'smem constant byte address 0x4 - core index']
  #allocation1 [shape = 'u32[72,128]{1,0:T(1,128)}', space=vmem, size = 0x9000, scoped, tag = 'internal scratch']
  %s0 = inlined_call_operand.vmem [shape: bf16[8,256], index: 0, kind: input, shape index: {}]
  %s1 = inlined_call_operand.vmem [shape: bf16[4,32], index: 1, kind: input, shape index: {}]
  %s2 = inlined_call_operand.vmem [shape: f32[32,128], index: 2, kind: input, shape index: {}]
  %s3 = inlined_call_operand.vmem [shape: f32[1,128], index: 3, kind: input, shape index: {}]
  %s4 = inlined_call_operand.vmem [shape: f32[1,128], index: 4, kind: input, shape index: {}]
  %s5 = inlined_call_operand.vmem [shape: f32[1,128], index: 5, kind: input, shape index: {}]
  %s6 = inlined_call_operand.hbm [shape: f32[2,128], index: 6, kind: output, shape index: {}]
  %s7 = sld [smem:[#allocation0]]
  $region34: #{regression_model_forward.1} parent=0
    _
  %s9 = ssub.s32 1, %s7
  %s10 = scalar_select 0, %s9, %s7
  $region1: #{regression_model_forward.1} parent=0
    #allocation2 [shape = 'u8[1024]{0}', space=vmem, size = 0x400, scoped, tag = 'output window, operand 0, single buffered']
    #allocation3 [shape = 's32[1]{0}', space=sflag, size = 0x4, scoped, tag = 'scoped memory for regression_model_forward.1']
    %11 = vsyncpa [#allocation3], 0
    // Predicated region
    $region2: #{regression_model_forward.1} parent=1 // pred_check
      _
    $region3: #{regression_model_forward.1} parent=1 // pred_check_branch
      %13 = sbr.rel (0) target = $region5
    $region4: #{regression_model_forward.1} parent=1 // pred_region
      _
    $region5: #{regression_model_forward.1} parent=1 // pred_fallthru
      _
    // Predicated region
    $region6: #{regression_model_forward.1} parent=1 // pred_check
      _
    $region7: #{regression_model_forward.1} parent=1 // pred_check_branch
      %15 = sbr.rel (0) target = $region9
    $region8: #{regression_model_forward.1} parent=1 // pred_region
      _
    $region9: #{regression_model_forward.1} parent=1 // pred_fallthru
      _
    // Predicated region
    $region10: #{regression_model_forward.1} parent=1 // pred_check
      _
    $region11: #{regression_model_forward.1} parent=1 // pred_check_branch
      %17 = sbr.rel (0) target = $region13
    $region12: #{regression_model_forward.1} parent=1 // pred_region
      _
    $region13: #{regression_model_forward.1} parent=1 // pred_fallthru
      _
    // Predicated region
    $region14: #{regression_model_forward.1} parent=1 // pred_check
      _
    $region15: #{regression_model_forward.1} parent=1 // pred_check_branch
      %19 = sbr.rel (0) target = $region17
    $region16: #{regression_model_forward.1} parent=1 // pred_region
      _
    $region17: #{regression_model_forward.1} parent=1 // pred_fallthru
      _
    // Predicated region
    $region18: #{regression_model_forward.1} parent=1 // pred_check
      _
    $region19: #{regression_model_forward.1} parent=1 // pred_check_branch
      %21 = sbr.rel (0) target = $region21
    $region20: #{regression_model_forward.1} parent=1 // pred_region
      _
    $region21: #{regression_model_forward.1} parent=1 // pred_fallthru
      _
    // Predicated region
    $region22: #{regression_model_forward.1} parent=1 // pred_check
      _
    $region23: #{regression_model_forward.1} parent=1 // pred_check_branch
      %23 = sbr.rel (0) target = $region25
    $region24: #{regression_model_forward.1} parent=1 // pred_region
      _
    $region25: #{regression_model_forward.1} parent=1 // pred_fallthru
      _
    %v25 = vld [vmem:[%s1] sm:$0x3]
    %v26 = vld [vmem:[%s0] sm:$0x33]
    %27 = vxpose.xlu0.c.b16.start [1/8] %v25, 128
    %28 = vxpose.xlu0.c.b16.cont [2/8] 0, 128
    %29 = vxpose.xlu0.c.b16.cont [3/8] 0, 128
    %30 = vxpose.xlu0.c.b16.cont [4/8] 0, 128
    %31 = vxpose.xlu0.c.b16.cont [5/8] 0, 128
    %32 = vxpose.xlu0.c.b16.cont [6/8] 0, 128
    %33 = vxpose.xlu0.c.b16.cont [7/8] 0, 128
    %34 = vxpose.xlu0.c.b16.end [8/8] 0, 128
    %v35 = vpop.trf.xlu0
    %v36 = vpop.trf.xlu0
    %v37 = vpop.trf.xlu0
    %v38 = vpop.trf.xlu0
    %v39 = vpop.trf.xlu0
    %v40 = vpop.trf.xlu0
    %v41 = vpop.trf.xlu0
    %v42 = vpop.trf.xlu0
    %v44 = vunpack.c.l.b16 %v26
    %v45 = vunpack.c.h.b16 %v26
    %v46 = vpack.c.b16 %v44, %v44
    %v47 = vpack.c.b16 %v45, %v45
    %vm48 = vcmask 31744
    %v50 = vsel %vm48, %v35, 0
    %v53 = vsel %vm48, %v36, 0
    %vm55 = vcmask 1041408
    %v57 = vsel %vm55, %v46, 0
    %v60 = vsel %vm55, %v47, 0
    %62 = vmatpush.bf16.msra.mxu0 0
    %63 = vmatpush.bf16.msra.mxu0 0
    %64 = vmatpush.bf16.msra.mxu0 0
    %65 = vmatpush.bf16.msra.mxu0 0
    %66 = vmatpush.bf16.msra.mxu0 0
    %67 = vmatpush.bf16.msra.mxu0 0
    %68 = vmatpush.bf16.msra.mxu0 0
    %69 = vmatpush.bf16.msra.mxu0 %v57
    %70 = vmatmul.bf16.gmra.mxu0 %v50
    %v71 = vpop.f32.mrf.mxu0
    %v72 = vadd.f32 0.0, %v71
    %v73 = vpop.f32.mrf.mxu0
    %v74 = vadd.f32 0.0, %v73
    %75 = vmatmul.bf16.gmra.mxu0 %v53
    %v76 = vpop.f32.mrf.mxu0
    %v77 = vadd.f32 0.0, %v76
    %v78 = vpop.f32.mrf.mxu0
    %v79 = vadd.f32 0.0, %v78
    %80 = vdwg.mxu0
    %81 = vmatpush.bf16.msra.mxu0 0
    %82 = vmatpush.bf16.msra.mxu0 0
    %83 = vmatpush.bf16.msra.mxu0 0
    %84 = vmatpush.bf16.msra.mxu0 0
    %85 = vmatpush.bf16.msra.mxu0 0
    %86 = vmatpush.bf16.msra.mxu0 0
    %87 = vmatpush.bf16.msra.mxu0 0
    %88 = vmatpush.bf16.msra.mxu0 %v60
    %89 = vmatmul.bf16.gmra.mxu0 %v50
    %v90 = vpop.f32.mrf.mxu0
    %v91 = vadd.f32 0.0, %v90
    %v92 = vpop.f32.mrf.mxu0
    %v93 = vadd.f32 0.0, %v92
    %94 = vmatmul.bf16.gmra.mxu0 %v53
    %v95 = vpop.f32.mrf.mxu0
    %v96 = vadd.f32 0.0, %v95
    %v97 = vpop.f32.mrf.mxu0
    %v98 = vadd.f32 0.0, %v97
    %99 = vdwg.mxu0
    %v100 = vmax.f32 %v72, 0.0
    %v101 = vmax.f32 %v91, 0.0
    %v102 = vmax.f32 %v74, 0.0
    %v103 = vmax.f32 %v93, 0.0
    %v104 = vmax.f32 %v77, 0.0
    %v105 = vmax.f32 %v96, 0.0
    %v106 = vmax.f32 %v79, 0.0
    %v107 = vmax.f32 %v98, 0.0
    %v108 = vadd.f32 %v100, %v101
    %109 = vadd.xlane.f32.xlu0 %v108
    %v110 = vpop.xlane.xlu0 %109
    %v111 = vadd.f32 %v102, %v103
    %112 = vadd.xlane.f32.xlu0 %v111
    %v113 = vpop.xlane.xlu0 %112
    %v114 = vadd.f32 %v104, %v105
    %115 = vadd.xlane.f32.xlu0 %v114
    %v116 = vpop.xlane.xlu0 %115
    %v117 = vadd.f32 %v106, %v107
    %118 = vadd.xlane.f32.xlu0 %v117
    %v119 = vpop.xlane.xlu0 %118
    %v120 = vld [vmem:[%s0] sm:$0xcc]
    %v122 = vunpack.c.l.b16 %v120
    %v123 = vunpack.c.h.b16 %v120
    %v124 = vpack.c.b16 %v122, %v122
    %v125 = vpack.c.b16 %v123, %v123
    %v126 = vrot.slane %v124, 2
    %v127 = vrot.slane %v125, 2
    %v129 = vsel %vm55, %v126, 0
    %v132 = vsel %vm55, %v127, 0
    %134 = vmatpush.bf16.msra.mxu0 0
    %135 = vmatpush.bf16.msra.mxu0 0
    %136 = vmatpush.bf16.msra.mxu0 0
    %137 = vmatpush.bf16.msra.mxu0 0
    %138 = vmatpush.bf16.msra.mxu0 0
    %139 = vmatpush.bf16.msra.mxu0 0
    %140 = vmatpush.bf16.msra.mxu0 0
    %141 = vmatpush.bf16.msra.mxu0 %v129
    %142 = vmatmul.bf16.gmra.mxu0 %v50
    %v143 = vpop.f32.mrf.mxu0
    %v144 = vadd.f32 0.0, %v143
    %v145 = vpop.f32.mrf.mxu0
    %v146 = vadd.f32 0.0, %v145
    %147 = vmatmul.bf16.gmra.mxu0 %v53
    %v148 = vpop.f32.mrf.mxu0
    %v149 = vadd.f32 0.0, %v148
    %v150 = vpop.f32.mrf.mxu0
    %v151 = vadd.f32 0.0, %v150
    %152 = vdwg.mxu0
    %153 = vmatpush.bf16.msra.mxu0 0
    %154 = vmatpush.bf16.msra.mxu0 0
    %155 = vmatpush.bf16.msra.mxu0 0
    %156 = vmatpush.bf16.msra.mxu0 0
    %157 = vmatpush.bf16.msra.mxu0 0
    %158 = vmatpush.bf16.msra.mxu0 0
    %159 = vmatpush.bf16.msra.mxu0 0
    %160 = vmatpush.bf16.msra.mxu0 %v132
    %161 = vmatmul.bf16.gmra.mxu0 %v50
    %v162 = vpop.f32.mrf.mxu0
    %v163 = vadd.f32 0.0, %v162
    %v164 = vpop.f32.mrf.mxu0
    %v165 = vadd.f32 0.0, %v164
    %166 = vmatmul.bf16.gmra.mxu0 %v53
    %v167 = vpop.f32.mrf.mxu0
    %v168 = vadd.f32 0.0, %v167
    %v169 = vpop.f32.mrf.mxu0
    %v170 = vadd.f32 0.0, %v169
    %171 = vdwg.mxu0
    %v172 = vmax.f32 %v144, 0.0
    %v173 = vmax.f32 %v163, 0.0
    %v174 = vmax.f32 %v146, 0.0
    %v175 = vmax.f32 %v165, 0.0
    %v176 = vmax.f32 %v149, 0.0
    %v177 = vmax.f32 %v168, 0.0
    %v178 = vmax.f32 %v151, 0.0
    %v179 = vmax.f32 %v170, 0.0
    %v180 = vadd.f32 %v172, %v173
    %181 = vadd.xlane.f32.xlu0 %v180
    %v182 = vpop.xlane.xlu0 %181
    %v183 = vadd.f32 %v174, %v175
    %184 = vadd.xlane.f32.xlu0 %v183
    %v185 = vpop.xlane.xlu0 %184
    %v186 = vadd.f32 %v176, %v177
    %187 = vadd.xlane.f32.xlu0 %v186
    %v188 = vpop.xlane.xlu0 %187
    %v189 = vadd.f32 %v178, %v179
    %190 = vadd.xlane.f32.xlu0 %v189
    %v191 = vpop.xlane.xlu0 %190
    %vm192 = vcmask 7168
    %v193 = vsel %vm192, %v110, %v182
    %v194 = vsel %vm192, %v113, %v185
    %v195 = vsel %vm192, %v116, %v188
    %v196 = vsel %vm192, %v119, %v191
    %v197 = vld [vmem:[%s2] sm:$0xff]
    %v198 = vld [vmem:[%s2 + $0x8] sm:$0xff]
    %v199 = vld [vmem:[%s2 + $0x10] sm:$0xff]
    %v200 = vld [vmem:[%s2 + $0x18] sm:$0xff]
    %v201 = vld [vmem:[%s3] sm:$0x1]
    %v203 = vperm.slane %v201, 0
    %205 = vxpose.xlu0.b32.start [1/16] %v193, 128
    %206 = vxpose.xlu0.b32.cont [2/16] %v194, 128
    %207 = vxpose.xlu0.b32.cont [3/16] %v195, 128
    %208 = vxpose.xlu0.b32.cont [4/16] %v196, 128
    %209 = vxpose.xlu0.b32.cont [5/16] 0.0, 128
    %210 = vxpose.xlu0.b32.cont [6/16] 0.0, 128
    %211 = vxpose.xlu0.b32.cont [7/16] 0.0, 128
    %212 = vxpose.xlu0.b32.cont [8/16] 0.0, 128
    %213 = vxpose.xlu0.b32.cont [9/16] 0.0, 128
    %214 = vxpose.xlu0.b32.cont [10/16] 0.0, 128
    %215 = vxpose.xlu0.b32.cont [11/16] 0.0, 128
    %216 = vxpose.xlu0.b32.cont [12/16] 0.0, 128
    %217 = vxpose.xlu0.b32.cont [13/16] 0.0, 128
    %218 = vxpose.xlu0.b32.cont [14/16] 0.0, 128
    %219 = vxpose.xlu0.b32.cont [15/16] 0.0, 128
    %220 = vxpose.xlu0.b32.end [16/16] 0.0, 128
    %v221 = vpop.trf.xlu0
    %v222 = vpop.trf.xlu0
    %v223 = vpop.trf.xlu0
    %v224 = vpop.trf.xlu0
    %v225 = vpop.trf.xlu0
    %v226 = vpop.trf.xlu0
    %v227 = vpop.trf.xlu0
    %v228 = vpop.trf.xlu0
    %v229 = vpop.trf.xlu0
    %v230 = vpop.trf.xlu0
    %v231 = vpop.trf.xlu0
    %v232 = vpop.trf.xlu0
    %v233 = vpop.trf.xlu0
    %v234 = vpop.trf.xlu0
    %v235 = vpop.trf.xlu0
    %v236 = vpop.trf.xlu0
    %vm237 = vcmask 261120
    %v239 = vsel %vm237, %v221, 0
    %241 = vmatpush.msra.mxu0 0.0
    %242 = vmatpush.msra.mxu0 0.0
    %243 = vmatpush.msra.mxu0 0.0
    %244 = vmatpush.msra.mxu0 0.0
    %245 = vmatpush.msra.mxu0 0.0
    %246 = vmatpush.msra.mxu0 0.0
    %247 = vmatpush.msra.mxu0 0.0
    %248 = vmatpush.msra.mxu0 0.0
    %249 = vmatpush.msra.mxu0 0.0
    %250 = vmatpush.msra.mxu0 0.0
    %251 = vmatpush.msra.mxu0 0.0
    %252 = vmatpush.msra.mxu0 0.0
    %253 = vmatpush.msra.mxu0 %v200
    %254 = vmatpush.msra.mxu0 %v199
    %255 = vmatpush.msra.mxu0 %v198
    %256 = vmatpush.msra.mxu0 %v197
    %257 = vmatmul.f32.gmra.mxu0 %v239
    %v258 = vpop.f32.mrf.mxu0
    %v259 = vadd.f32 %v203, %v258
    %260 = vdwg.mxu0
    %v261 = vld [vmem:[%s4] sm:$0x1]
    %vm262 = vcmp.gt.f32.partialorder %v261, 0.0
    %v263 = vmul.f32 %v259, 1.442695
    %v264 = vpow.pop %v263
    %v265 = vsel %vm262, 1, 0
    %v266 = vperm.slane %v265, 0
    %vm267 = vcmp.eq.s32.totalorder %v266, 1
    %v268 = vsel %vm267, %v264, %v259
    %v269 = vld [vmem:[%s5] sm:$0x1]
    %vm270 = vcmp.gt.f32.partialorder %v269, 0.0
    %v271 = vxor.u32 %v268, 2147483648
    %v272 = vmul.f32 %v271, 1.442695
    %v273 = vpow.pop %v272
    %v274 = vadd.f32 %v273, 1.0
    %v275 = vrcp.pop %v274
    %v276 = vmul.f32 %v274, %v275
    %v277 = vsub.f32 1.0, %v276
    %v278 = vmul.f32 %v275, %v277
    %v279 = vadd.f32 %v275, %v278
    %vm280 = vweird.f32 %v274
    %vm281 = vweird.f32 %v275
    %vm282 = vmor %vm280, %vm281
    %v283 = vsel %vm282, %v275, %v279
    %v284 = vand.u32 2147483647, %v274
    %vm285 = vcmp.eq.f32.partialorder %v284, 8.507059e+37
    %v286 = vand.u32 %v274, 2147483648
    %v287 = vor.u32 1.1754944e-38, %v286
    %v288 = vsel %vm285, %v287, %v283
    %v289 = vmul.f32 1.0, %v288
    %v290 = vsel %vm270, 1, 0
    %v291 = vperm.slane %v290, 0
    %vm292 = vcmp.eq.s32.totalorder %v291, 1
    %v293 = vsel %vm292, %v289, %v268
    %294 = vst [vmem:[#allocation2] sm:$0x3] %v293
    // Predicated region
    $region26: #{regression_model_forward.1} parent=1 // pred_check
      _
    $region27: #{regression_model_forward.1} parent=1 // pred_check_branch
      %296 = sbr.rel (0) target = $region29
    $region28: #{regression_model_forward.1} parent=1 // pred_region
      %298 = vsyncadd [#allocation3], 0
      %s300 = sshll.u32 [#allocation2], 4
      %s301 = int_to_ptr.vmem [resolvable:$true] %s300
      %s302 = sshll.u32 %s6, 4
      %s303 = int_to_ptr.hbm [resolvable:$true] %s302
      %305 = dma.vmem_to_hbm [thread:$0]  %s301, 32, %s303, [#allocation3]
    $region29: #{regression_model_forward.1} parent=1 // pred_fallthru
      _
    // Predicated region
    $region30: #{regression_model_forward.1} parent=1 // pred_check
      _
    $region31: #{regression_model_forward.1} parent=1 // pred_check_branch
      %307 = sbr.rel (0) target = $region33
    $region32: #{regression_model_forward.1} parent=1 // pred_region
      %309 = dma.done [#allocation3], 32
    $region33: #{regression_model_forward.1} parent=1 // pred_fallthru
      _
    %310 = vsyncpa [#allocation3], 1

</llo_original>
